<compile_context>
chip_gen: v5e
topology: v5e:2x2
jax: 0.10.0
libtpu: 0.0.40
codegen_flags: <defaults>
</compile_context>

<pallas_src>
import jax
import jax.numpy as jnp
from jax.experimental import pallas as pl
from jax.experimental.pallas import tpu as pltpu


def _make_sa_kernel(tile_b):
    def kernel(x_ref, w1_ref, b1_ref, w2_ref, b2_ref, o_ref):
        # x_ref: (TILE_B, C_in, TILE_N)   w1_ref: (H, C_in)    b1_ref: (H, 1)
        # w2_ref: (C_out, H)              b2_ref: (C_out, 1)   o_ref: (TILE_B, C_out, TILE_N)
        w1 = w1_ref[...]
        w2 = w2_ref[...]
        b1 = b1_ref[...]          # f32, lane-broadcast
        b2 = b2_ref[...]          # f32, lane-broadcast
        cdt = w1.dtype            # compute dtype fed to the MXU (f32 or bf16)
        for i in range(tile_b):   # static, small (<=8), fully unrolled
            x = x_ref[i].astype(cdt)                         # matches x.float() when cdt=f32
            h = jnp.dot(w1, x, preferred_element_type=jnp.float32) + b1
            h = jnp.maximum(h, 0.0)
            y = jnp.dot(w2, h.astype(cdt), preferred_element_type=jnp.float32) + b2
            o_ref[i] = jnp.maximum(y, 0.0).astype(o_ref.dtype)
    return kernel


def pointnet_set_abstraction(x, w1, b1, w2, b2, *, out_dtype=None,
                             compute_dtype=None, tile_n_max=8192):
    """x: (B, C_in, N).  Returns (B, C_out, N).

    w1: (H, C_in), b1: (H,)    -- first Conv1d(kernel=1) weights (PyTorch layout, squeezed)
    w2: (C_out, H), b2: (C_out,)
    out_dtype / compute_dtype default to float32 (exactly the PyTorch module's x.float()
    semantics); pass jnp.bfloat16 to halve output HBM writeback / feed the MXU bf16.
    """
    B, C_in, N = x.shape
    H = w1.shape[0]
    C_out = w2.shape[0]
    out_dtype = jnp.dtype(out_dtype) if out_dtype is not None else jnp.dtype(jnp.float32)
    compute_dtype = (jnp.dtype(compute_dtype) if compute_dtype is not None
                     else jnp.dtype(jnp.float32))

    # ---- lane tile on the points axis (multiple of 128, or full N when N < 128) ----
    # VMEM budget: double-buffered x/out blocks + single-buffered f32 intermediates,
    # kept under ~12 MiB so it fits v5e's 16 MiB scoped default and v7x's 64 MiB VMEM.
    per_lane = (2 * (C_in * jnp.dtype(x.dtype).itemsize + C_out * out_dtype.itemsize)
                + 4 * (C_in + H + C_out))
    vmem_budget = 12 << 20
    tile_n_cap = max(128, min(int(tile_n_max), (vmem_budget // per_lane) // 128 * 128))
    if N >= 128:
        tile_n = min(tile_n_cap, (N // 128) * 128)   # <= N, multiple of 128; ragged tail masked
    else:
        tile_n = N                                   # block == full array dim (allowed)
    n_tiles = -(-N // tile_n)

    # ---- pack several batch elements per step for small-N workloads ----
    tile_b = 1
    if B > 1 and tile_n * n_tiles <= 1024:
        want = max(1, min(8, 8192 // max(tile_n, 1)))
        for cand in range(min(want, B), 0, -1):
            if B % cand == 0:
                tile_b = cand
                break

    # ---- v7x: keep >= 2 total grid steps so both TensorCores get work ----
    if (B // tile_b) * n_tiles < 2:
        if tile_b > 1:
            for cand in range(tile_b - 1, 0, -1):
                if B % cand == 0 and (B // cand) * n_tiles >= 2:
                    tile_b = cand
                    break
        elif n_tiles == 1 and tile_n >= 256:
            tile_n = ((tile_n // 2 + 127) // 128) * 128
            n_tiles = -(-N // tile_n)
        # else: single tiny tile; nothing useful to split.

    # ---- parameters: weights in compute dtype (cast once), biases stay f32 ----
    w1_c = w1.astype(compute_dtype)                       # (H, C_in)
    w2_c = w2.astype(compute_dtype)                       # (C_out, H)
    b1_r = b1.reshape(H, 1).astype(jnp.float32)           # (H, 1)
    b2_r = b2.reshape(C_out, 1).astype(jnp.float32)       # (C_out, 1)

    grid = (B // tile_b, n_tiles)

    return pl.pallas_call(
        _make_sa_kernel(tile_b),
        out_shape=jax.ShapeDtypeStruct((B, C_out, N), out_dtype),
        grid_spec=pltpu.PrefetchScalarGridSpec(
            num_scalar_prefetch=0,
            grid=grid,
            in_specs=[
                pl.BlockSpec((tile_b, C_in, tile_n), lambda b, nt: (b, 0, nt)),
                pl.BlockSpec((H, C_in), lambda b, nt: (0, 0)),
                pl.BlockSpec((H, 1), lambda b, nt: (0, 0)),
                pl.BlockSpec((C_out, H), lambda b, nt: (0, 0)),
                pl.BlockSpec((C_out, 1), lambda b, nt: (0, 0)),
            ],
            out_specs=pl.BlockSpec((tile_b, C_out, tile_n), lambda b, nt: (b, 0, nt)),
        ),
        compiler_params=pltpu.CompilerParams(
            dimension_semantics=("parallel", "parallel")),
    )(x, w1_c, b1_r, w2_c, b2_r)


if __name__ == "__main__":
    key = jax.random.PRNGKey(0)
    k_x, k_w1, k_b1, k_w2, k_b2, k_x2 = jax.random.split(key, 6)

    C_in, H, C_out = 4, 32, 64                      # out_channels = [32, 64]

    w1 = jax.random.normal(k_w1, (H, C_in), dtype=jnp.float32) * 0.1
    b1 = jax.random.normal(k_b1, (H,), dtype=jnp.float32) * 0.1
    w2 = jax.random.normal(k_w2, (C_out, H), dtype=jnp.float32) * 0.1
    b2 = jax.random.normal(k_b2, (C_out,), dtype=jnp.float32) * 0.1

    def reference(x):
        xf = x.astype(jnp.float32)
        h = jnp.maximum(jnp.einsum("bcn,hc->bhn", xf, w1) + b1[None, :, None], 0.0)
        return jnp.maximum(jnp.einsum("bhn,oh->bon", h, w2) + b2[None, :, None], 0.0)

    # --- Test 1: small, lane-exact shapes (B=2, N=128), default f32 semantics ---
    x1 = jax.random.normal(k_x, (2, C_in, 128), dtype=jnp.float32)
    out1 = jax.block_until_ready(pointnet_set_abstraction(x1, w1, b1, w2, b2))
    ref1 = reference(x1)
    assert out1.shape == (2, C_out, 128) and out1.dtype == jnp.float32
    assert jnp.allclose(out1, ref1, atol=1e-5, rtol=1e-5)

    # --- Test 1b: bf16 output + bf16 MXU operands (optional fast path, loose tol) ---
    out1_bf = jax.block_until_ready(
        pointnet_set_abstraction(x1, w1, b1, w2, b2,
                                 out_dtype=jnp.bfloat16, compute_dtype=jnp.bfloat16))
    assert out1_bf.dtype == jnp.bfloat16
    assert jnp.allclose(out1_bf.astype(jnp.float32), ref1, atol=5e-2, rtol=5e-2)

    # --- Test 2: ragged N (192) + batch packing (B=3), no wrapper pad/slice ---
    x2 = jax.random.normal(k_x2, (3, C_in, 192), dtype=jnp.float32)
    out2 = jax.block_until_ready(pointnet_set_abstraction(x2, w1, b1, w2, b2))
    ref2 = reference(x2)
    assert out2.shape == (3, C_out, 192)
    assert jnp.allclose(out2, ref2, atol=1e-5, rtol=1e-5)

    print("KERNEL_OK")
</pallas_src>

<mosaic_0001>
module attributes {stable_mosaic.version = 11 : i64} {
  func.func @kernel(%arg0: i32, %arg1: i32, %arg2: memref<1x4x128xf32, #tpu.memory_space<vmem>>, %arg3: memref<32x4xf32, #tpu.memory_space<vmem>>, %arg4: memref<32x1xf32, #tpu.memory_space<vmem>>, %arg5: memref<64x32xf32, #tpu.memory_space<vmem>>, %arg6: memref<64x1xf32, #tpu.memory_space<vmem>>, %arg7: memref<1x64x128xf32, #tpu.memory_space<vmem>>) attributes {dimension_semantics = [#tpu.dimension_semantics<parallel>, #tpu.dimension_semantics<parallel>], iteration_bounds = array<i64: 2, 1>, scalar_prefetch = 0 : i64, scratch_operands = 0 : i64, tpu.core_type = #tpu.core_type<tc>, window_params = [{transform_indices = @transform_0, window_bounds = array<i64: 1, 4, 128>}, {pipeline_mode = #tpu.pipeline_mode<synchronous>, transform_indices = @transform_1, window_bounds = array<i64: 32, 4>}, {pipeline_mode = #tpu.pipeline_mode<synchronous>, transform_indices = @transform_2, window_bounds = array<i64: 32, 1>}, {pipeline_mode = #tpu.pipeline_mode<synchronous>, transform_indices = @transform_3, window_bounds = array<i64: 64, 32>}, {pipeline_mode = #tpu.pipeline_mode<synchronous>, transform_indices = @transform_4, window_bounds = array<i64: 64, 1>}, {transform_indices = @transform_5, window_bounds = array<i64: 1, 64, 128>}]} {
    %c0 = arith.constant 0 : index
    %c0_0 = arith.constant 0 : index
    %0 = vector.load %arg3[%c0, %c0_0] : memref<32x4xf32, #tpu.memory_space<vmem>>, vector<32x4xf32>
    %c0_1 = arith.constant 0 : index
    %c0_2 = arith.constant 0 : index
    %1 = vector.load %arg5[%c0_1, %c0_2] : memref<64x32xf32, #tpu.memory_space<vmem>>, vector<64x32xf32>
    %c0_3 = arith.constant 0 : index
    %c0_4 = arith.constant 0 : index
    %2 = vector.load %arg4[%c0_3, %c0_4] : memref<32x1xf32, #tpu.memory_space<vmem>>, vector<32x1xf32>
    %c0_5 = arith.constant 0 : index
    %c0_6 = arith.constant 0 : index
    %3 = vector.load %arg6[%c0_5, %c0_6] : memref<64x1xf32, #tpu.memory_space<vmem>>, vector<64x1xf32>
    %c0_7 = arith.constant 0 : index
    %c0_8 = arith.constant 0 : index
    %c0_9 = arith.constant 0 : index
    %4 = vector.load %arg2[%c0_7, %c0_8, %c0_9] : memref<1x4x128xf32, #tpu.memory_space<vmem>>, vector<1x4x128xf32>
    %5 = vector.shape_cast %4 : vector<1x4x128xf32> to vector<4x128xf32>
    %cst = arith.constant dense<0.000000e+00> : vector<32x128xf32>
    %6 = tpu.matmul %0, %5, %cst {dimension_numbers = #tpu.dot_dimension_numbers<[1], [0], [0], [1], [0, 0, 1, 1], [], []>} : vector<32x4xf32>, vector<4x128xf32>, vector<32x128xf32> -> vector<32x128xf32>
    %7 = vector.broadcast %2 : vector<32x1xf32> to vector<32x128xf32>
    %8 = arith.addf %6, %7 : vector<32x128xf32>
    %cst_10 = arith.constant 0.000000e+00 : f32
    %9 = vector.broadcast %cst_10 : f32 to vector<32x128xf32>
    %10 = arith.maximumf %8, %9 : vector<32x128xf32>
    %cst_11 = arith.constant dense<0.000000e+00> : vector<64x128xf32>
    %11 = tpu.matmul %1, %10, %cst_11 {dimension_numbers = #tpu.dot_dimension_numbers<[1], [0], [0], [1], [0, 0, 1, 1], [], []>} : vector<64x32xf32>, vector<32x128xf32>, vector<64x128xf32> -> vector<64x128xf32>
    %12 = vector.broadcast %3 : vector<64x1xf32> to vector<64x128xf32>
    %13 = arith.addf %11, %12 : vector<64x128xf32>
    %cst_12 = arith.constant 0.000000e+00 : f32
    %14 = vector.broadcast %cst_12 : f32 to vector<64x128xf32>
    %15 = arith.maximumf %13, %14 : vector<64x128xf32>
    %c0_13 = arith.constant 0 : index
    %c0_14 = arith.constant 0 : index
    %c0_15 = arith.constant 0 : index
    %16 = vector.load %arg7[%c0_13, %c0_14, %c0_15] : memref<1x64x128xf32, #tpu.memory_space<vmem>>, vector<1x64x128xf32>
    %17 = vector.shape_cast %16 : vector<1x64x128xf32> to vector<64x128xf32>
    %18 = vector.shape_cast %15 : vector<64x128xf32> to vector<1x64x128xf32>
    tpu.vector_store %arg7[%c0_13, %c0_14, %c0_15], %18 {strides = array<i32>} : memref<1x64x128xf32, #tpu.memory_space<vmem>>, vector<1x64x128xf32>,
    return
  }
  func.func @transform_0(%arg0: i32, %arg1: i32) -> (i32, i32, i32) {
    %c0_i32 = arith.constant 0 : i32
    %c0_i32_0 = arith.constant 0 : i32
    return %arg0, %c0_i32, %arg1 : i32, i32, i32
  }
  func.func @transform_1(%arg0: i32, %arg1: i32) -> (i32, i32) {
    %c0_i32 = arith.constant 0 : i32
    %c0_i32_0 = arith.constant 0 : i32
    %c0_i32_1 = arith.constant 0 : i32
    return %c0_i32, %c0_i32_0 : i32, i32
  }
  func.func @transform_2(%arg0: i32, %arg1: i32) -> (i32, i32) {
    %c0_i32 = arith.constant 0 : i32
    %c0_i32_0 = arith.constant 0 : i32
    %c0_i32_1 = arith.constant 0 : i32
    return %c0_i32, %c0_i32_0 : i32, i32
  }
  func.func @transform_3(%arg0: i32, %arg1: i32) -> (i32, i32) {
    %c0_i32 = arith.constant 0 : i32
    %c0_i32_0 = arith.constant 0 : i32
    %c0_i32_1 = arith.constant 0 : i32
    return %c0_i32, %c0_i32_0 : i32, i32
  }
  func.func @transform_4(%arg0: i32, %arg1: i32) -> (i32, i32) {
    %c0_i32 = arith.constant 0 : i32
    %c0_i32_0 = arith.constant 0 : i32
    %c0_i32_1 = arith.constant 0 : i32
    return %c0_i32, %c0_i32_0 : i32, i32
  }
  func.func @transform_5(%arg0: i32, %arg1: i32) -> (i32, i32, i32) {
    %c0_i32 = arith.constant 0 : i32
    %c0_i32_0 = arith.constant 0 : i32
    return %arg0, %c0_i32, %arg1 : i32, i32, i32
  }
}

</mosaic_0001>

<llo_original>
// kernel: tpu_custom_call.1
$region0: #{tpu_custom_call.1}
  #allocation0 [shape = 'u32[]', space=smem, size = 0x4, offset = 0x4, fixed_abs, tag = 'smem constant byte address 0x4 - core index']
  #allocation1 [shape = 'u32[72,128]{1,0:T(1,128)}', space=vmem, size = 0x9000, scoped, tag = 'internal scratch']
  %s0 = inlined_call_operand.vmem [shape: f32[2,4,128], index: 0, kind: input, shape index: {}]
  %s1 = inlined_call_operand.vmem [shape: f32[32,4], index: 1, kind: input, shape index: {}]
  %s2 = inlined_call_operand.vmem [shape: f32[32,1], index: 2, kind: input, shape index: {}]
  %s3 = inlined_call_operand.vmem [shape: f32[64,32], index: 3, kind: input, shape index: {}]
  %s4 = inlined_call_operand.vmem [shape: f32[64,1], index: 4, kind: input, shape index: {}]
  %s5 = inlined_call_operand.hbm [shape: f32[2,64,128], index: 5, kind: output, shape index: {}]
  %s6 = sld [smem:[#allocation0]]
  $region53: #{tpu_custom_call.1} parent=0
    _
  %s8 = ssub.s32 1, %s6
  %s9 = scalar_select 0, %s8, %s6
  $region1: #{tpu_custom_call.1} parent=0
    #allocation2 [shape = 'u8[65536]{0}', space=vmem, size = 0x10000, scoped, tag = 'output window, operand 0']
    #allocation3 [shape = 's32[2]{0}', space=sflag, size = 0x8, scoped, tag = 'scoped memory for tpu_custom_call.1']
    %10 = vsyncpa [#allocation3], 0
    %s11 = scalar_lea.sflag [#allocation3], 1
    %12 = vsyncpa %s11, 0
    loop: start=0, step=1, limit=4
    $region2: #{tpu_custom_call.1} parent=1 // loop_pre_header
      _
    $region3: #{tpu_custom_call.1} parent=1 // loop_header
      %s14 = sphi 0, %s18
      %p15 = scmp.ge.s32.totalorder %s14, 4
      %s21 = sphi 0, %s33
      %s22 = sphi 0, %s29
      %s23 = sphi 0, %s21
      %s24 = sphi 0, %s22
      %s25 = sphi 0, %s23
      %s26 = sphi 0, %s24
      %s38 = sphi 0, %s40
      %s41 = sphi 0, %s38
      %s42 = sphi 0, %s41
      %s58 = sphi 0, %s42
      %s62 = sphi 0, %s62
      %s64 = sphi 0, %s62
      %s65 = sphi 0, %s64
      %s79 = sphi 0, %s65
      %s83 = sphi 0, %s83
      %s85 = sphi 0, %s83
      %s86 = sphi 0, %s85
      %s100 = sphi 0, %s86
      %s104 = sphi 0, %s104
      %s106 = sphi 0, %s104
      %s107 = sphi 0, %s106
      %s121 = sphi 0, %s107
      %s125 = sphi 0, %s125
      %s127 = sphi 0, %s125
      %s128 = sphi 0, %s127
      %s142 = sphi 0, %s128
      %s150 = sphi 0, %s152
      %s153 = sphi 0, %s150
      %s154 = sphi 0, %s153
      %s170 = sphi 0, %s154
    $region4: #{tpu_custom_call.1} parent=1 // loop_header_branch
      %17 = sbr.rel (%p15) target = $region8
    $region5: #{tpu_custom_call.1} parent=1 // loop_body
      %s19 = ssub.s32 %s14, 1
      %s20 = ssub.s32 %s14, 2
      %s27 = sadd.s32 1, %s22
      %p28 = scmp.ge.s32.totalorder %s27, 1
      %s29 = scalar_select %p28, 0, %s27
      %s30 = sadd.s32 1, %s21
      %s31 = scalar_select %p28, %s30, %s21
      %p32 = scmp.ge.s32.totalorder %s31, 2
      %s33 = scalar_select %p32, 0, %s31
      %s34 = ssub.s32 %s21, %s33
      %s35 = ssub.s32 %s22, %s29
      %s36 = sor.u32 %s34, %s35
      %p37 = scmp.eq.s32.totalorder %s36, 0
      %s39 = sadd.s32 %s38, 1
      %s40 = scalar_select %p37, %s38, %s39
      %p43 = pneg %p37
      %p44 = scmp.eq.s32.totalorder %s14, 1
      %p45 = por %p43, %p44
      %p46 = scmp.ne.s32.totalorder %s38, %s41
      %p47 = scmp.eq.s32.totalorder %s14, 0
      %p48 = por %p46, %p47
      %p49 = scmp.ne.s32.totalorder %s38, %s41
      %p50 = scmp.eq.s32.totalorder %s19, 1
      %p51 = por %p49, %p50
      %p52 = scmp.ne.s32.totalorder %s41, %s42
      %p53 = scmp.eq.s32.totalorder %s19, 0
      %p54 = por %p52, %p53
      %p55 = scmp.ne.s32.totalorder %s41, %s42
      %p56 = scmp.eq.s32.totalorder %s20, 1
      %p57 = por %p55, %p56
      %p59 = scmp.ne.s32.totalorder %s42, %s58
      %p60 = scmp.eq.s32.totalorder %s20, 0
      %p61 = por %p59, %p60
      %s63 = sadd.s32 %s62, 1
      %p66 = scmp.eq.s32.totalorder %s14, 1
      %p67 = scmp.ne.s32.totalorder %s62, %s64
      %p68 = scmp.eq.s32.totalorder %s14, 0
      %p69 = por %p67, %p68
      %p70 = scmp.ne.s32.totalorder %s62, %s64
      %p71 = scmp.eq.s32.totalorder %s19, 1
      %p72 = por %p70, %p71
      %p73 = scmp.ne.s32.totalorder %s64, %s65
      %p74 = scmp.eq.s32.totalorder %s19, 0
      %p75 = por %p73, %p74
      %p76 = scmp.ne.s32.totalorder %s64, %s65
      %p77 = scmp.eq.s32.totalorder %s20, 1
      %p78 = por %p76, %p77
      %p80 = scmp.ne.s32.totalorder %s65, %s79
      %p81 = scmp.eq.s32.totalorder %s20, 0
      %p82 = por %p80, %p81
      %s84 = sadd.s32 %s83, 1
      %p87 = scmp.eq.s32.totalorder %s14, 1
      %p88 = scmp.ne.s32.totalorder %s83, %s85
      %p89 = scmp.eq.s32.totalorder %s14, 0
      %p90 = por %p88, %p89
      %p91 = scmp.ne.s32.totalorder %s83, %s85
      %p92 = scmp.eq.s32.totalorder %s19, 1
      %p93 = por %p91, %p92
      %p94 = scmp.ne.s32.totalorder %s85, %s86
      %p95 = scmp.eq.s32.totalorder %s19, 0
      %p96 = por %p94, %p95
      %p97 = scmp.ne.s32.totalorder %s85, %s86
      %p98 = scmp.eq.s32.totalorder %s20, 1
      %p99 = por %p97, %p98
      %p101 = scmp.ne.s32.totalorder %s86, %s100
      %p102 = scmp.eq.s32.totalorder %s20, 0
      %p103 = por %p101, %p102
      %s105 = sadd.s32 %s104, 1
      %p108 = scmp.eq.s32.totalorder %s14, 1
      %p109 = scmp.ne.s32.totalorder %s104, %s106
      %p110 = scmp.eq.s32.totalorder %s14, 0
      %p111 = por %p109, %p110
      %p112 = scmp.ne.s32.totalorder %s104, %s106
      %p113 = scmp.eq.s32.totalorder %s19, 1
      %p114 = por %p112, %p113
      %p115 = scmp.ne.s32.totalorder %s106, %s107
      %p116 = scmp.eq.s32.totalorder %s19, 0
      %p117 = por %p115, %p116
      %p118 = scmp.ne.s32.totalorder %s106, %s107
      %p119 = scmp.eq.s32.totalorder %s20, 1
      %p120 = por %p118, %p119
      %p122 = scmp.ne.s32.totalorder %s107, %s121
      %p123 = scmp.eq.s32.totalorder %s20, 0
      %p124 = por %p122, %p123
      %s126 = sadd.s32 %s125, 1
      %p129 = scmp.eq.s32.totalorder %s14, 1
      %p130 = scmp.ne.s32.totalorder %s125, %s127
      %p131 = scmp.eq.s32.totalorder %s14, 0
      %p132 = por %p130, %p131
      %p133 = scmp.ne.s32.totalorder %s125, %s127
      %p134 = scmp.eq.s32.totalorder %s19, 1
      %p135 = por %p133, %p134
      %p136 = scmp.ne.s32.totalorder %s127, %s128
      %p137 = scmp.eq.s32.totalorder %s19, 0
      %p138 = por %p136, %p137
      %p139 = scmp.ne.s32.totalorder %s127, %s128
      %p140 = scmp.eq.s32.totalorder %s20, 1
      %p141 = por %p139, %p140
      %p143 = scmp.ne.s32.totalorder %s128, %s142
      %p144 = scmp.eq.s32.totalorder %s20, 0
      %p145 = por %p143, %p144
      %s146 = ssub.s32 %s21, %s33
      %s147 = ssub.s32 %s22, %s29
      %s148 = sor.u32 %s146, %s147
      %p149 = scmp.eq.s32.totalorder %s148, 0
      %s151 = sadd.s32 %s150, 1
      %s152 = scalar_select %p149, %s150, %s151
      %p155 = pneg %p149
      %p156 = scmp.eq.s32.totalorder %s14, 1
      %p157 = por %p155, %p156
      %p158 = scmp.ne.s32.totalorder %s150, %s153
      %p159 = scmp.eq.s32.totalorder %s14, 0
      %p160 = por %p158, %p159
      %p161 = scmp.ne.s32.totalorder %s150, %s153
      %p162 = scmp.eq.s32.totalorder %s19, 1
      %p163 = por %p161, %p162
      %p164 = scmp.ne.s32.totalorder %s153, %s154
      %p165 = scmp.eq.s32.totalorder %s19, 0
      %p166 = por %p164, %p165
      %p167 = scmp.ne.s32.totalorder %s153, %s154
      %p168 = scmp.eq.s32.totalorder %s20, 1
      %p169 = por %p167, %p168
      %p171 = scmp.ne.s32.totalorder %s154, %s170
      %p172 = scmp.eq.s32.totalorder %s20, 0
      %p173 = por %p171, %p172
      %p174 = scmp.le.s32.totalorder 1, %s14
      %p175 = scmp.lt.s32.totalorder %s14, 3
      %p176 = pnand %p174, %p175
      %p177 = pneg %p176
      // Predicated region
      $region9: #{tpu_custom_call.1} parent=5 // pred_check
        _
      $region10: #{tpu_custom_call.1} parent=5 // pred_check_branch
        %179 = sbr.rel (%p176) target = $region12
      $region11: #{tpu_custom_call.1} parent=5 // pred_region
        %s180 = ssub.s32 %s14, 1
        // Predicated region
        $region13: #{tpu_custom_call.1} parent=11 // pred_check
          %p181 = pneg %p75
        $region14: #{tpu_custom_call.1} parent=11 // pred_check_branch
          %183 = sbr.rel (%p181) target = $region16
        $region15: #{tpu_custom_call.1} parent=11 // pred_region
          _
        $region16: #{tpu_custom_call.1} parent=11 // pred_fallthru
          _
        // Predicated region
        $region17: #{tpu_custom_call.1} parent=11 // pred_check
          %p184 = pneg %p96
        $region18: #{tpu_custom_call.1} parent=11 // pred_check_branch
          %186 = sbr.rel (%p184) target = $region20
        $region19: #{tpu_custom_call.1} parent=11 // pred_region
          _
        $region20: #{tpu_custom_call.1} parent=11 // pred_fallthru
          _
        // Predicated region
        $region21: #{tpu_custom_call.1} parent=11 // pred_check
          %p187 = pneg %p117
        $region22: #{tpu_custom_call.1} parent=11 // pred_check_branch
          %189 = sbr.rel (%p187) target = $region24
        $region23: #{tpu_custom_call.1} parent=11 // pred_region
          _
        $region24: #{tpu_custom_call.1} parent=11 // pred_fallthru
          _
        // Predicated region
        $region25: #{tpu_custom_call.1} parent=11 // pred_check
          %p190 = pneg %p138
        $region26: #{tpu_custom_call.1} parent=11 // pred_check_branch
          %192 = sbr.rel (%p190) target = $region28
        $region27: #{tpu_custom_call.1} parent=11 // pred_region
          _
        $region28: #{tpu_custom_call.1} parent=11 // pred_fallthru
          _
      $region12: #{tpu_custom_call.1} parent=5 // pred_fallthru
        _
      %p193 = scmp.lt.s32.totalorder %s14, 2
      // Predicated region
      $region29: #{tpu_custom_call.1} parent=5 // pred_check
        %p194 = pneg %p193
      $region30: #{tpu_custom_call.1} parent=5 // pred_check_branch
        %196 = sbr.rel (%p194) target = $region32
      $region31: #{tpu_custom_call.1} parent=5 // pred_region
        // Predicated region
        $region33: #{tpu_custom_call.1} parent=31 // pred_check
          %p197 = pneg %p48
        $region34: #{tpu_custom_call.1} parent=31 // pred_check_branch
          %199 = sbr.rel (%p197) target = $region36
        $region35: #{tpu_custom_call.1} parent=31 // pred_region
          %p200 = scmp.lt.s32.totalorder %s21, 1
          %s201 = scalar_select %p200, %s21, 1
          %p202 = scmp.lt.s32.totalorder %s22, 0
          %s203 = scalar_select %p202, %s22, 0
          %s204 = sadd.s32 %s203, %s201
          %s205 = smul.addr %s204, 4
          %s206 = scalar_lea.vmem %s0, %s205
        $region36: #{tpu_custom_call.1} parent=31 // pred_fallthru
          _
      $region32: #{tpu_custom_call.1} parent=5 // pred_fallthru
        _
      %p207 = scmp.le.s32.totalorder 1, %s14
      %p208 = scmp.lt.s32.totalorder %s14, 3
      %p209 = pnand %p207, %p208
      %p210 = pneg %p209
      // Predicated region
      $region37: #{tpu_custom_call.1} parent=5 // pred_check
        _
      $region38: #{tpu_custom_call.1} parent=5 // pred_check_branch
        %212 = sbr.rel (%p209) target = $region40
      $region39: #{tpu_custom_call.1} parent=5 // pred_region
        %s213 = ssub.s32 %s14, 1
        %p214 = scmp.lt.s32.totalorder %s23, 1
        %s215 = scalar_select %p214, %s23, 1
        %p216 = scmp.lt.s32.totalorder %s24, 0
        %s217 = scalar_select %p216, %s24, 0
        %s218 = sadd.s32 %s217, %s215
        %s219 = smul.addr %s218, 4
        %s220 = scalar_lea.vmem %s0, %s219
        %p221 = pneg %p54
        %p222 = pneg %p51
        %p223 = pneg %p75
        %p224 = pneg %p72
        %p225 = pneg %p96
        %p226 = pneg %p93
        %p227 = pneg %p117
        %p228 = pneg %p114
        %p229 = pneg %p138
        %p230 = pneg %p135
        %p231 = pneg %p166
        %p232 = pneg %p163
        %s233 = sand.u32 %s153, 1
        %s234 = scalar_lea.sflag [#allocation3], %s233
        %s235 = sand.u32 %s153, 1
        %s236 = smul.addr %s235, 64
        %s237 = scalar_lea.vmem [#allocation2], %s236
        %p238 = scmp.lt.s32.totalorder %s23, 1
        %s239 = scalar_select %p238, %s23, 1
        %p240 = scmp.lt.s32.totalorder %s24, 0
        %s241 = scalar_select %p240, %s24, 0
        %s242 = sadd.s32 %s241, %s239
        %s243 = smul.addr %s242, 4
        %s244 = scalar_lea.vmem %s0, %s243
        %v245 = vld [vmem:[%s1] sm:$0xff]
        %v246 = vld [vmem:[%s1 + $0x8] sm:$0xff]
        %v247 = vld [vmem:[%s1 + $0x10] sm:$0xff]
        %v248 = vld [vmem:[%s1 + $0x18] sm:$0xff]
        %v249 = vld [vmem:[%s3] sm:$0xff]
        %v250 = vld [vmem:[%s3 + $0x8] sm:$0xff]
        %v251 = vld [vmem:[%s3 + $0x10] sm:$0xff]
        %v252 = vld [vmem:[%s3 + $0x18] sm:$0xff]
        %v253 = vld [vmem:[%s3 + $0x20] sm:$0xff]
        %v254 = vld [vmem:[%s3 + $0x28] sm:$0xff]
        %v255 = vld [vmem:[%s3 + $0x30] sm:$0xff]
        %v256 = vld [vmem:[%s3 + $0x38] sm:$0xff]
        %v257 = vld [vmem:[%s2] sm:$0xff]
        %v258 = vld [vmem:[%s2 + $0x8] sm:$0xff]
        %v259 = vld [vmem:[%s2 + $0x10] sm:$0xff]
        %v260 = vld [vmem:[%s2 + $0x18] sm:$0xff]
        %v261 = vld [vmem:[%s4] sm:$0xff]
        %v262 = vld [vmem:[%s4 + $0x8] sm:$0xff]
        %v263 = vld [vmem:[%s4 + $0x10] sm:$0xff]
        %v264 = vld [vmem:[%s4 + $0x18] sm:$0xff]
        %v265 = vld [vmem:[%s4 + $0x20] sm:$0xff]
        %v266 = vld [vmem:[%s4 + $0x28] sm:$0xff]
        %v267 = vld [vmem:[%s4 + $0x30] sm:$0xff]
        %v268 = vld [vmem:[%s4 + $0x38] sm:$0xff]
        %v269 = vld [vmem:[%s244] sm:$0xf]
        %271 = vset.pattern.permute.xlu0 0
        %272 = vperm.xlu0 %271, %v257
        %v273 = vpop.permute.xlu0 %272
        %276 = vset.pattern.permute.xlu0 0
        %277 = vperm.xlu0 %276, %v258
        %v278 = vpop.permute.xlu0 %277
        %281 = vset.pattern.permute.xlu0 0
        %282 = vperm.xlu0 %281, %v259
        %v283 = vpop.permute.xlu0 %282
        %286 = vset.pattern.permute.xlu0 0
        %287 = vperm.xlu0 %286, %v260
        %v288 = vpop.permute.xlu0 %287
        %vm290 = vcmask 31744
        %v292 = vsel %vm290, %v245, 0
        %v295 = vsel %vm290, %v246, 0
        %v298 = vsel %vm290, %v247, 0
        %v301 = vsel %vm290, %v248, 0
        %vm303 = vcmask 1043456
        %v305 = vsel %vm303, %v269, 0
        %307 = vmatpush.msra.mxu0 0.0
        %308 = vmatpush.msra.mxu0 0.0
        %309 = vmatpush.msra.mxu0 0.0
        %310 = vmatpush.msra.mxu0 0.0
        %311 = vmatpush.msra.mxu0 0.0
        %312 = vmatpush.msra.mxu0 0.0
        %313 = vmatpush.msra.mxu0 0.0
        %314 = vmatpush.msra.mxu0 0.0
        %315 = vmatpush.msra.mxu0 0.0
        %316 = vmatpush.msra.mxu0 0.0
        %317 = vmatpush.msra.mxu0 0.0
        %318 = vmatpush.msra.mxu0 0.0
        %319 = vmatpush.msra.mxu0 0.0
        %320 = vmatpush.msra.mxu0 0.0
        %321 = vmatpush.msra.mxu0 0.0
        %322 = vmatpush.msra.mxu0 %v305
        %323 = vmatmul.f32.gmra.mxu0 %v292
        %v324 = vpop.f32.mrf.mxu0
        %v325 = vadd.f32 %v273, %v324
        %326 = vmatmul.f32.gmra.mxu0 %v295
        %v327 = vpop.f32.mrf.mxu0
        %v328 = vadd.f32 %v278, %v327
        %329 = vmatmul.f32.gmra.mxu0 %v298
        %v330 = vpop.f32.mrf.mxu0
        %v331 = vadd.f32 %v283, %v330
        %332 = vmatmul.f32.gmra.mxu0 %v301
        %v333 = vpop.f32.mrf.mxu0
        %v334 = vadd.f32 %v288, %v333
        %335 = vdwg.mxu0
        %v336 = vmax.f32 %v325, 0.0
        %v337 = vmax.f32 %v328, 0.0
        %v338 = vmax.f32 %v331, 0.0
        %v339 = vmax.f32 %v334, 0.0
        %341 = vset.pattern.permute.xlu0 0
        %342 = vperm.xlu0 %341, %v261
        %v343 = vpop.permute.xlu0 %342
        %346 = vset.pattern.permute.xlu0 0
        %347 = vperm.xlu0 %346, %v262
        %v348 = vpop.permute.xlu0 %347
        %351 = vset.pattern.permute.xlu0 0
        %352 = vperm.xlu0 %351, %v263
        %v353 = vpop.permute.xlu0 %352
        %356 = vset.pattern.permute.xlu0 0
        %357 = vperm.xlu0 %356, %v264
        %v358 = vpop.permute.xlu0 %357
        %361 = vset.pattern.permute.xlu0 0
        %362 = vperm.xlu0 %361, %v265
        %v363 = vpop.permute.xlu0 %362
        %366 = vset.pattern.permute.xlu0 0
        %367 = vperm.xlu0 %366, %v266
        %v368 = vpop.permute.xlu0 %367
        %371 = vset.pattern.permute.xlu0 0
        %372 = vperm.xlu0 %371, %v267
        %v373 = vpop.permute.xlu0 %372
        %376 = vset.pattern.permute.xlu0 0
        %377 = vperm.xlu0 %376, %v268
        %v378 = vpop.permute.xlu0 %377
        %vm380 = vcmask 261120
        %v382 = vsel %vm380, %v249, 0
        %v385 = vsel %vm380, %v250, 0
        %v388 = vsel %vm380, %v251, 0
        %v391 = vsel %vm380, %v252, 0
        %v394 = vsel %vm380, %v253, 0
        %v397 = vsel %vm380, %v254, 0
        %v400 = vsel %vm380, %v255, 0
        %v403 = vsel %vm380, %v256, 0
        %405 = vmatpush.msra.mxu0 0.0
        %406 = vmatpush.msra.mxu0 0.0
        %407 = vmatpush.msra.mxu0 0.0
        %408 = vmatpush.msra.mxu0 0.0
        %409 = vmatpush.msra.mxu0 0.0
        %410 = vmatpush.msra.mxu0 0.0
        %411 = vmatpush.msra.mxu0 0.0
        %412 = vmatpush.msra.mxu0 0.0
        %413 = vmatpush.msra.mxu0 0.0
        %414 = vmatpush.msra.mxu0 0.0
        %415 = vmatpush.msra.mxu0 0.0
        %416 = vmatpush.msra.mxu0 0.0
        %417 = vmatpush.msra.mxu0 %v339
        %418 = vmatpush.msra.mxu0 %v338
        %419 = vmatpush.msra.mxu0 %v337
        %420 = vmatpush.msra.mxu0 %v336
        %421 = vmatmul.f32.gmra.mxu0 %v382
        %v422 = vpop.f32.mrf.mxu0
        %v423 = vadd.f32 %v343, %v422
        %424 = vmatmul.f32.gmra.mxu0 %v385
        %v425 = vpop.f32.mrf.mxu0
        %v426 = vadd.f32 %v348, %v425
        %427 = vmatmul.f32.gmra.mxu0 %v388
        %v428 = vpop.f32.mrf.mxu0
        %v429 = vadd.f32 %v353, %v428
        %430 = vmatmul.f32.gmra.mxu0 %v391
        %v431 = vpop.f32.mrf.mxu0
        %v432 = vadd.f32 %v358, %v431
        %433 = vmatmul.f32.gmra.mxu0 %v394
        %v434 = vpop.f32.mrf.mxu0
        %v435 = vadd.f32 %v363, %v434
        %436 = vmatmul.f32.gmra.mxu0 %v397
        %v437 = vpop.f32.mrf.mxu0
        %v438 = vadd.f32 %v368, %v437
        %439 = vmatmul.f32.gmra.mxu0 %v400
        %v440 = vpop.f32.mrf.mxu0
        %v441 = vadd.f32 %v373, %v440
        %442 = vmatmul.f32.gmra.mxu0 %v403
        %v443 = vpop.f32.mrf.mxu0
        %v444 = vadd.f32 %v378, %v443
        %445 = vdwg.mxu0
        %v446 = vmax.f32 %v423, 0.0
        %v447 = vmax.f32 %v426, 0.0
        %v448 = vmax.f32 %v429, 0.0
        %v449 = vmax.f32 %v432, 0.0
        %v450 = vmax.f32 %v435, 0.0
        %v451 = vmax.f32 %v438, 0.0
        %v452 = vmax.f32 %v441, 0.0
        %v453 = vmax.f32 %v444, 0.0
        %454 = vst [vmem:[%s237] sm:$0xff] %v446
        %455 = vst [vmem:[%s237 + $0x8] sm:$0xff] %v447
        %456 = vst [vmem:[%s237 + $0x10] sm:$0xff] %v448
        %457 = vst [vmem:[%s237 + $0x18] sm:$0xff] %v449
        %458 = vst [vmem:[%s237 + $0x20] sm:$0xff] %v450
        %459 = vst [vmem:[%s237 + $0x28] sm:$0xff] %v451
        %460 = vst [vmem:[%s237 + $0x30] sm:$0xff] %v452
        %461 = vst [vmem:[%s237 + $0x38] sm:$0xff] %v453
        %s462 = sand.u32 %s153, 1
        %s463 = scalar_lea.sflag [#allocation3], %s462
        %s464 = sand.u32 %s153, 1
        %s465 = smul.addr %s464, 64
        %s466 = scalar_lea.vmem [#allocation2], %s465
        // Predicated region
        $region41: #{tpu_custom_call.1} parent=39 // pred_check
          %p467 = pneg %p163
        $region42: #{tpu_custom_call.1} parent=39 // pred_check_branch
          %469 = sbr.rel (%p467) target = $region44
        $region43: #{tpu_custom_call.1} parent=39 // pred_region
          %471 = vsyncadd %s463, 0
          %s472 = smul.addr %s23, 8
          %s473 = sadd.s32 %s24, %s472
          %s474 = smul.addr %s473, 8
          %s475 = scalar_lea.hbm %s5, %s474
          %s476 = sshll.u32 %s466, 4
          %s477 = int_to_ptr.vmem [resolvable:$true] %s476
          %s478 = sshll.u32 %s475, 4
          %s479 = int_to_ptr.hbm [resolvable:$true] %s478
          %484 = dma.vmem_to_hbm [thread:$0]  %s477, 1024, %s479, %s463, 128, 128, 8
        $region44: #{tpu_custom_call.1} parent=39 // pred_fallthru
          _
      $region40: #{tpu_custom_call.1} parent=5 // pred_fallthru
        _
      %p485 = scmp.le.s32.totalorder 2, %s14
      // Predicated region
      $region45: #{tpu_custom_call.1} parent=5 // pred_check
        %p486 = pneg %p485
      $region46: #{tpu_custom_call.1} parent=5 // pred_check_branch
        %488 = sbr.rel (%p486) target = $region48
      $region47: #{tpu_custom_call.1} parent=5 // pred_region
        %s489 = ssub.s32 %s14, 2
        // Predicated region
        $region49: #{tpu_custom_call.1} parent=47 // pred_check
          %p490 = pneg %p169
        $region50: #{tpu_custom_call.1} parent=47 // pred_check_branch
          %492 = sbr.rel (%p490) target = $region52
        $region51: #{tpu_custom_call.1} parent=47 // pred_region
          %s493 = sand.u32 %s154, 1
          %s494 = scalar_lea.sflag [#allocation3], %s493
          %s495 = sand.u32 %s154, 1
          %s496 = smul.addr %s495, 64
          %s497 = scalar_lea.vmem [#allocation2], %s496
          %499 = dma.done %s494, 1024
        $region52: #{tpu_custom_call.1} parent=47 // pred_fallthru
          _
      $region48: #{tpu_custom_call.1} parent=5 // pred_fallthru
        _
    $region6: #{tpu_custom_call.1} parent=1 // loop_footer
      %s18 = sadd.s32 1, %s14
    $region7: #{tpu_custom_call.1} parent=1 // loop_footer_branch
      %13 = sbr.rel target = $region3
    $region8: #{tpu_custom_call.1} parent=1 // loop_exit
      _
    %500 = vsyncpa [#allocation3], 1
    %s501 = scalar_lea.sflag [#allocation3], 1
    %502 = vsyncpa %s501, 1

</llo_original>
